<compile_context>
chip_gen: v6e
topology: v6e:2x2x1
jax: 0.10.0
libtpu: 0.0.40
codegen_flags: <defaults>
</compile_context>

<pallas_src>
import jax
import jax.numpy as jnp
from jax.experimental import pallas as pl
from jax.experimental.pallas import tpu as pltpu


def _mlp_kernel(x_ref, w1_ref, b1_ref, w2_ref, b2_ref, o_ref):
    # First linear + ReLU.  x/w1 may be bf16; accumulate in fp32 on the MXU.
    h = jnp.dot(x_ref[...], w1_ref[...], preferred_element_type=jnp.float32)
    h = jnp.maximum(h + b1_ref[...], 0.0)          # b1 is (1, H), broadcasts
    # Second linear (cast h to the weight dtype; no-op in fp32 mode).
    y = jnp.dot(h.astype(w2_ref.dtype), w2_ref[...],
                preferred_element_type=jnp.float32)
    o_ref[...] = (y + b2_ref[...]).astype(o_ref.dtype)


def data_encoder_forward(x, w1, b1, w2, b2, *, block_b=8192, use_bf16=False):
    """Fused MLP forward: relu(x @ w1 + b1) @ w2 + b2.

    x:  [B, D_in]   float32
    w1: [D_in, H]   float32
    b1: [1, H]      float32
    w2: [H, D_out]  float32
    b2: [1, D_out]  float32
    returns [B, D_out] float32
    """
    B, D_in = x.shape
    H = w1.shape[1]
    D_out = w2.shape[1]
    out_dtype = x.dtype

    if use_bf16:
        # Halve HBM traffic on x and the (tiny) weights; biases stay fp32 and
        # are added after the fp32 accumulation.
        x = x.astype(jnp.bfloat16)
        w1 = w1.astype(jnp.bfloat16)
        w2 = w2.astype(jnp.bfloat16)

    itemsize = 2 if use_bf16 else 4
    # Sublane alignment: 8 rows for fp32, 16 for bf16 (packed sublanes).
    row_align = 16 if use_bf16 else 8

    # Batch tile: as large as requested, but no bigger than the (aligned) batch.
    b_aligned = pl.cdiv(B, row_align) * row_align
    tb = min(block_b, b_aligned)
    tb = max(row_align, (tb // row_align) * row_align)

    # Pad batch to a multiple of the tile so every grid step is full.
    b_pad = pl.cdiv(B, tb) * tb
    if b_pad != B:
        x = jnp.pad(x, ((0, b_pad - B), (0, 0)))

    grid = (b_pad // tb,)

    cost = pl.CostEstimate(
        flops=2 * B * (D_in * H + H * D_out),
        transcendentals=0,
        bytes_accessed=(B * D_in * itemsize            # read x
                        + B * D_out * 4                # write y (fp32)
                        + (D_in * H + H * D_out) * itemsize
                        + (H + D_out) * 4),            # weights + biases
    )

    out = pl.pallas_call(
        _mlp_kernel,
        out_shape=jax.ShapeDtypeStruct((b_pad, D_out), out_dtype),
        grid_spec=pltpu.PrefetchScalarGridSpec(
            num_scalar_prefetch=0,
            grid=grid,
            in_specs=[
                pl.BlockSpec((tb, D_in), lambda i: (i, 0)),     # x: tiled over batch
                pl.BlockSpec((D_in, H), lambda i: (0, 0)),      # w1: VMEM-resident
                pl.BlockSpec((1, H), lambda i: (0, 0)),         # b1: VMEM-resident
                pl.BlockSpec((H, D_out), lambda i: (0, 0)),     # w2: VMEM-resident
                pl.BlockSpec((1, D_out), lambda i: (0, 0)),     # b2: VMEM-resident
            ],
            out_specs=pl.BlockSpec((tb, D_out), lambda i: (i, 0)),
        ),
        compiler_params=pltpu.CompilerParams(
            dimension_semantics=("parallel",),   # megacore-shard batch on v7x
        ),
        cost_estimate=cost,
    )(x, w1, b1, w2, b2)

    return out[:B] if b_pad != B else out


def init_params(input_dim, output_dim, hidden_dim=4, seed=0):
    """Deterministic synthetic parameters matching DataEncoder's shapes."""
    key = jax.random.PRNGKey(seed)
    k1, k2, k3, k4 = jax.random.split(key, 4)
    # nn.Linear(input_dim, hidden_dim): weight [H, D_in], bias [H] -> keep W.T
    w1 = jax.random.normal(k1, (input_dim, hidden_dim), jnp.float32) * 0.1
    b1 = jax.random.normal(k2, (1, hidden_dim), jnp.float32) * 0.1
    # nn.Linear(hidden_dim, output_dim): weight [D_out, H], bias [D_out] -> W.T
    w2 = jax.random.normal(k3, (hidden_dim, output_dim), jnp.float32) * 0.1
    b2 = jax.random.normal(k4, (1, output_dim), jnp.float32) * 0.1
    return w1, b1, w2, b2


def _reference(x, w1, b1, w2, b2):
    return jnp.maximum(x @ w1 + b1, 0.0) @ w2 + b2


if __name__ == "__main__":
    input_dim, hidden_dim, output_dim = 16, 4, 8
    w1, b1, w2, b2 = init_params(input_dim, output_dim, hidden_dim, seed=0)

    # --- Small batch (matches the module's toy usage) ---------------------
    key = jax.random.PRNGKey(0)
    x_small = jax.random.normal(key, (2, input_dim), jnp.float32)
    out_small = jax.block_until_ready(
        data_encoder_forward(x_small, w1, b1, w2, b2))
    ref_small = _reference(x_small, w1, b1, w2, b2)
    assert out_small.shape == (2, output_dim)
    assert jnp.allclose(out_small, ref_small, atol=1e-5, rtol=1e-5)

    # --- Larger, non-aligned batch: exercises grid, padding, resident weights
    key2 = jax.random.PRNGKey(1)
    x_big = jax.random.normal(key2, (2055, input_dim), jnp.float32)
    out_big = jax.block_until_ready(
        data_encoder_forward(x_big, w1, b1, w2, b2, block_b=256))
    ref_big = _reference(x_big, w1, b1, w2, b2)
    assert out_big.shape == (2055, output_dim)
    assert jnp.allclose(out_big, ref_big, atol=1e-5, rtol=1e-5)

    # --- Optional bf16 I/O path (looser tolerance) ------------------------
    out_bf16 = jax.block_until_ready(
        data_encoder_forward(x_big, w1, b1, w2, b2, block_b=1024, use_bf16=True))
    assert out_bf16.shape == (2055, output_dim)
    assert jnp.allclose(out_bf16, ref_big, atol=5e-2, rtol=5e-2)

    print("KERNEL_OK")
</pallas_src>

<mosaic_0001>
module attributes {stable_mosaic.version = 11 : i64} {
  func.func @_mlp_kernel(%arg0: i32, %arg1: memref<8x16xf32, #tpu.memory_space<vmem>>, %arg2: memref<16x4xf32, #tpu.memory_space<vmem>>, %arg3: memref<1x4xf32, #tpu.memory_space<vmem>>, %arg4: memref<4x8xf32, #tpu.memory_space<vmem>>, %arg5: memref<1x8xf32, #tpu.memory_space<vmem>>, %arg6: memref<8x8xf32, #tpu.memory_space<vmem>>) attributes {dimension_semantics = [#tpu.dimension_semantics<parallel>], iteration_bounds = array<i64: 1>, scalar_prefetch = 0 : i64, scratch_operands = 0 : i64, tpu.core_type = #tpu.core_type<tc>, window_params = [{transform_indices = @transform_0, window_bounds = array<i64: 8, 16>}, {pipeline_mode = #tpu.pipeline_mode<synchronous>, transform_indices = @transform_1, window_bounds = array<i64: 16, 4>}, {pipeline_mode = #tpu.pipeline_mode<synchronous>, transform_indices = @transform_2, window_bounds = array<i64: 1, 4>}, {pipeline_mode = #tpu.pipeline_mode<synchronous>, transform_indices = @transform_3, window_bounds = array<i64: 4, 8>}, {pipeline_mode = #tpu.pipeline_mode<synchronous>, transform_indices = @transform_4, window_bounds = array<i64: 1, 8>}, {transform_indices = @transform_5, window_bounds = array<i64: 8, 8>}]} {
    %c0 = arith.constant 0 : index
    %c0_0 = arith.constant 0 : index
    %0 = vector.load %arg1[%c0, %c0_0] : memref<8x16xf32, #tpu.memory_space<vmem>>, vector<8x16xf32>
    %c0_1 = arith.constant 0 : index
    %c0_2 = arith.constant 0 : index
    %1 = vector.load %arg2[%c0_1, %c0_2] : memref<16x4xf32, #tpu.memory_space<vmem>>, vector<16x4xf32>
    %cst = arith.constant dense<0.000000e+00> : vector<8x4xf32>
    %2 = tpu.matmul %0, %1, %cst {dimension_numbers = #tpu.dot_dimension_numbers<[1], [0], [0], [1], [0, 0, 1, 1], [], []>} : vector<8x16xf32>, vector<16x4xf32>, vector<8x4xf32> -> vector<8x4xf32>
    %c0_3 = arith.constant 0 : index
    %c0_4 = arith.constant 0 : index
    %3 = vector.load %arg3[%c0_3, %c0_4] : memref<1x4xf32, #tpu.memory_space<vmem>>, vector<1x4xf32>
    %4 = vector.broadcast %3 : vector<1x4xf32> to vector<8x4xf32>
    %5 = arith.addf %2, %4 : vector<8x4xf32>
    %cst_5 = arith.constant 0.000000e+00 : f32
    %6 = vector.broadcast %cst_5 : f32 to vector<8x4xf32>
    %7 = arith.maximumf %5, %6 : vector<8x4xf32>
    %c0_6 = arith.constant 0 : index
    %c0_7 = arith.constant 0 : index
    %8 = vector.load %arg4[%c0_6, %c0_7] : memref<4x8xf32, #tpu.memory_space<vmem>>, vector<4x8xf32>
    %cst_8 = arith.constant dense<0.000000e+00> : vector<8x8xf32>
    %9 = tpu.matmul %7, %8, %cst_8 {dimension_numbers = #tpu.dot_dimension_numbers<[1], [0], [0], [1], [0, 0, 1, 1], [], []>} : vector<8x4xf32>, vector<4x8xf32>, vector<8x8xf32> -> vector<8x8xf32>
    %c0_9 = arith.constant 0 : index
    %c0_10 = arith.constant 0 : index
    %10 = vector.load %arg5[%c0_9, %c0_10] : memref<1x8xf32, #tpu.memory_space<vmem>>, vector<1x8xf32>
    %11 = vector.broadcast %10 : vector<1x8xf32> to vector<8x8xf32>
    %12 = arith.addf %9, %11 : vector<8x8xf32>
    %c0_11 = arith.constant 0 : index
    %c0_12 = arith.constant 0 : index
    %13 = vector.load %arg6[%c0_11, %c0_12] : memref<8x8xf32, #tpu.memory_space<vmem>>, vector<8x8xf32>
    tpu.vector_store %arg6[%c0_11, %c0_12], %12 {strides = array<i32>} : memref<8x8xf32, #tpu.memory_space<vmem>>, vector<8x8xf32>,
    return
  }
  func.func @transform_0(%arg0: i32) -> (i32, i32) {
    %c0_i32 = arith.constant 0 : i32
    %c0_i32_0 = arith.constant 0 : i32
    return %arg0, %c0_i32 : i32, i32
  }
  func.func @transform_1(%arg0: i32) -> (i32, i32) {
    %c0_i32 = arith.constant 0 : i32
    %c0_i32_0 = arith.constant 0 : i32
    %c0_i32_1 = arith.constant 0 : i32
    return %c0_i32, %c0_i32_0 : i32, i32
  }
  func.func @transform_2(%arg0: i32) -> (i32, i32) {
    %c0_i32 = arith.constant 0 : i32
    %c0_i32_0 = arith.constant 0 : i32
    %c0_i32_1 = arith.constant 0 : i32
    return %c0_i32, %c0_i32_0 : i32, i32
  }
  func.func @transform_3(%arg0: i32) -> (i32, i32) {
    %c0_i32 = arith.constant 0 : i32
    %c0_i32_0 = arith.constant 0 : i32
    %c0_i32_1 = arith.constant 0 : i32
    return %c0_i32, %c0_i32_0 : i32, i32
  }
  func.func @transform_4(%arg0: i32) -> (i32, i32) {
    %c0_i32 = arith.constant 0 : i32
    %c0_i32_0 = arith.constant 0 : i32
    %c0_i32_1 = arith.constant 0 : i32
    return %c0_i32, %c0_i32_0 : i32, i32
  }
  func.func @transform_5(%arg0: i32) -> (i32, i32) {
    %c0_i32 = arith.constant 0 : i32
    %c0_i32_0 = arith.constant 0 : i32
    return %arg0, %c0_i32 : i32, i32
  }
}

</mosaic_0001>

<llo_original>
// kernel: tpu_custom_call.1
$region0: #{tpu_custom_call.1}
  #allocation0 [shape = 'u32[]', space=smem, size = 0x4, offset = 0x4, fixed_abs, tag = 'smem constant byte address 0x4 - core index']
  #allocation1 [shape = 'u32[144,128]{1,0:T(1,128)}', space=vmem, size = 0x12000, scoped, tag = 'internal scratch']
  %s0 = inlined_call_operand.vmem [shape: f32[8,16], index: 0, kind: input, shape index: {}]
  %s1 = inlined_call_operand.vmem [shape: f32[16,4], index: 1, kind: input, shape index: {}]
  %s2 = inlined_call_operand.vmem [shape: f32[1,4], index: 2, kind: input, shape index: {}]
  %s3 = inlined_call_operand.vmem [shape: f32[4,8], index: 3, kind: input, shape index: {}]
  %s4 = inlined_call_operand.vmem [shape: f32[1,8], index: 4, kind: input, shape index: {}]
  %s5 = inlined_call_operand.hbm [shape: f32[8,8], index: 5, kind: output, shape index: {}]
  %s6 = sld [smem:[#allocation0]]
  $region30: #{tpu_custom_call.1} parent=0
    _
  %s8 = ssub.s32 1, %s6
  %s9 = scalar_select 0, %s8, %s6
  $region1: #{tpu_custom_call.1} parent=0
    #allocation2 [shape = 'u8[4096]{0}', space=vmem, size = 0x1000, scoped, tag = 'output window, operand 0, single buffered']
    #allocation3 [shape = 's32[1]{0}', space=sflag, size = 0x4, scoped, tag = 'scoped memory for tpu_custom_call.1']
    %10 = vsyncpa [#allocation3], 0
    // Predicated region
    $region2: #{tpu_custom_call.1} parent=1 // pred_check
      _
    $region3: #{tpu_custom_call.1} parent=1 // pred_check_branch
      %12 = sbr.rel (0) target = $region5
    $region4: #{tpu_custom_call.1} parent=1 // pred_region
      _
    $region5: #{tpu_custom_call.1} parent=1 // pred_fallthru
      _
    // Predicated region
    $region6: #{tpu_custom_call.1} parent=1 // pred_check
      _
    $region7: #{tpu_custom_call.1} parent=1 // pred_check_branch
      %14 = sbr.rel (0) target = $region9
    $region8: #{tpu_custom_call.1} parent=1 // pred_region
      _
    $region9: #{tpu_custom_call.1} parent=1 // pred_fallthru
      _
    // Predicated region
    $region10: #{tpu_custom_call.1} parent=1 // pred_check
      _
    $region11: #{tpu_custom_call.1} parent=1 // pred_check_branch
      %16 = sbr.rel (0) target = $region13
    $region12: #{tpu_custom_call.1} parent=1 // pred_region
      _
    $region13: #{tpu_custom_call.1} parent=1 // pred_fallthru
      _
    // Predicated region
    $region14: #{tpu_custom_call.1} parent=1 // pred_check
      _
    $region15: #{tpu_custom_call.1} parent=1 // pred_check_branch
      %18 = sbr.rel (0) target = $region17
    $region16: #{tpu_custom_call.1} parent=1 // pred_region
      _
    $region17: #{tpu_custom_call.1} parent=1 // pred_fallthru
      _
    // Predicated region
    $region18: #{tpu_custom_call.1} parent=1 // pred_check
      _
    $region19: #{tpu_custom_call.1} parent=1 // pred_check_branch
      %20 = sbr.rel (0) target = $region21
    $region20: #{tpu_custom_call.1} parent=1 // pred_region
      _
    $region21: #{tpu_custom_call.1} parent=1 // pred_fallthru
      _
    %v21 = vld [vmem:[%s0] sm:$0xff]
    %v22 = vld [vmem:[%s1] sm:$0xff]
    %v23 = vld [vmem:[%s1 + $0x8] sm:$0xff]
    %v24 = vld [vmem:[%s2] sm:$0x1]
    %v26 = vlaneseq
    %v27 = vshrl.u32 %v26, 7
    %v28 = vsub.s32 0, %v27
    %v29 = vrot.slane %v24, %v28
    %vm31 = vcmask 130048
    %v33 = vsel %vm31, %v21, 0
    %35 = vmatprep.subr.mxu0 0.0
    %36 = vmatpush1.msra.mxu0 0.0
    %37 = vmatprep.subr.mxu0 0.0
    %38 = vmatpush1.msra.mxu0 0.0
    %39 = vmatprep.subr.mxu0 0.0
    %40 = vmatpush1.msra.mxu0 0.0
    %41 = vmatprep.subr.mxu0 0.0
    %42 = vmatpush1.msra.mxu0 0.0
    %43 = vmatprep.subr.mxu0 0.0
    %44 = vmatpush1.msra.mxu0 0.0
    %45 = vmatprep.subr.mxu0 0.0
    %46 = vmatpush1.msra.mxu0 0.0
    %47 = vmatprep.subr.mxu0 0.0
    %48 = vmatpush1.msra.mxu0 0.0
    %49 = vmatprep.subr.mxu0 0.0
    %50 = vmatpush1.msra.mxu0 0.0
    %51 = vmatprep.subr.mxu0 0.0
    %52 = vmatpush1.msra.mxu0 0.0
    %53 = vmatprep.subr.mxu0 0.0
    %54 = vmatpush1.msra.mxu0 0.0
    %55 = vmatprep.subr.mxu0 0.0
    %56 = vmatpush1.msra.mxu0 0.0
    %57 = vmatprep.subr.mxu0 0.0
    %58 = vmatpush1.msra.mxu0 0.0
    %59 = vmatprep.subr.mxu0 0.0
    %60 = vmatpush1.msra.mxu0 0.0
    %61 = vmatprep.subr.mxu0 0.0
    %62 = vmatpush1.msra.mxu0 0.0
    %63 = vmatprep.subr.mxu0 0.0
    %64 = vmatpush1.msra.mxu0 %v23
    %65 = vmatprep.subr.mxu0 0.0
    %66 = vmatpush1.msra.mxu0 %v22
    %67 = vmatprep.subr.mxu0 0.0
    %68 = vmatpush2.msra.mxu0 0.0
    %69 = vmatprep.subr.mxu0 0.0
    %70 = vmatpush2.msra.mxu0 0.0
    %71 = vmatprep.subr.mxu0 0.0
    %72 = vmatpush2.msra.mxu0 0.0
    %73 = vmatprep.subr.mxu0 0.0
    %74 = vmatpush2.msra.mxu0 0.0
    %75 = vmatprep.subr.mxu0 0.0
    %76 = vmatpush2.msra.mxu0 0.0
    %77 = vmatprep.subr.mxu0 0.0
    %78 = vmatpush2.msra.mxu0 0.0
    %79 = vmatprep.subr.mxu0 0.0
    %80 = vmatpush2.msra.mxu0 0.0
    %81 = vmatprep.subr.mxu0 0.0
    %82 = vmatpush2.msra.mxu0 0.0
    %83 = vmatprep.subr.mxu0 0.0
    %84 = vmatpush2.msra.mxu0 0.0
    %85 = vmatprep.subr.mxu0 0.0
    %86 = vmatpush2.msra.mxu0 0.0
    %87 = vmatprep.subr.mxu0 0.0
    %88 = vmatpush2.msra.mxu0 0.0
    %89 = vmatprep.subr.mxu0 0.0
    %90 = vmatpush2.msra.mxu0 0.0
    %91 = vmatprep.subr.mxu0 0.0
    %92 = vmatpush2.msra.mxu0 0.0
    %93 = vmatprep.subr.mxu0 0.0
    %94 = vmatpush2.msra.mxu0 0.0
    %95 = vmatprep.subr.mxu0 0.0
    %96 = vmatpush2.msra.mxu0 0.0
    %97 = vmatprep.subr.mxu0 0.0
    %98 = vmatpush2.msra.mxu0 0.0
    %99 = vmatprep.mubr.f32.mxu0 0.0
    %100 = vmatmul.mubr.f32.gmra.mxu0 %v33
    %v101 = vpop.f32.mrf.mxu0
    %v102 = vadd.f32 %v29, %v101
    %v103 = vpop.f32.mrf.mxu0
    %104 = vdwg.mxu0
    %v105 = vmax.f32 %v102, 0.0
    %v106 = vld [vmem:[%s3] sm:$0xf]
    %v107 = vld [vmem:[%s4] sm:$0x1]
    %v109 = vlaneseq
    %v110 = vshrl.u32 %v109, 7
    %v111 = vsub.s32 0, %v110
    %v112 = vrot.slane %v107, %v111
    %vm114 = vcmask 31744
    %v116 = vsel %vm114, %v105, 0
    %vm118 = vcmask 1043456
    %v120 = vsel %vm118, %v106, 0
    %122 = vmatprep.subr.mxu0 0.0
    %123 = vmatpush1.msra.mxu0 0.0
    %124 = vmatprep.subr.mxu0 0.0
    %125 = vmatpush1.msra.mxu0 0.0
    %126 = vmatprep.subr.mxu0 0.0
    %127 = vmatpush1.msra.mxu0 0.0
    %128 = vmatprep.subr.mxu0 0.0
    %129 = vmatpush1.msra.mxu0 0.0
    %130 = vmatprep.subr.mxu0 0.0
    %131 = vmatpush1.msra.mxu0 0.0
    %132 = vmatprep.subr.mxu0 0.0
    %133 = vmatpush1.msra.mxu0 0.0
    %134 = vmatprep.subr.mxu0 0.0
    %135 = vmatpush1.msra.mxu0 0.0
    %136 = vmatprep.subr.mxu0 0.0
    %137 = vmatpush1.msra.mxu0 0.0
    %138 = vmatprep.subr.mxu0 0.0
    %139 = vmatpush1.msra.mxu0 0.0
    %140 = vmatprep.subr.mxu0 0.0
    %141 = vmatpush1.msra.mxu0 0.0
    %142 = vmatprep.subr.mxu0 0.0
    %143 = vmatpush1.msra.mxu0 0.0
    %144 = vmatprep.subr.mxu0 0.0
    %145 = vmatpush1.msra.mxu0 0.0
    %146 = vmatprep.subr.mxu0 0.0
    %147 = vmatpush1.msra.mxu0 0.0
    %148 = vmatprep.subr.mxu0 0.0
    %149 = vmatpush1.msra.mxu0 0.0
    %150 = vmatprep.subr.mxu0 0.0
    %151 = vmatpush1.msra.mxu0 0.0
    %152 = vmatprep.subr.mxu0 0.0
    %153 = vmatpush1.msra.mxu0 %v120
    %154 = vmatprep.subr.mxu0 0.0
    %155 = vmatpush2.msra.mxu0 0.0
    %156 = vmatprep.subr.mxu0 0.0
    %157 = vmatpush2.msra.mxu0 0.0
    %158 = vmatprep.subr.mxu0 0.0
    %159 = vmatpush2.msra.mxu0 0.0
    %160 = vmatprep.subr.mxu0 0.0
    %161 = vmatpush2.msra.mxu0 0.0
    %162 = vmatprep.subr.mxu0 0.0
    %163 = vmatpush2.msra.mxu0 0.0
    %164 = vmatprep.subr.mxu0 0.0
    %165 = vmatpush2.msra.mxu0 0.0
    %166 = vmatprep.subr.mxu0 0.0
    %167 = vmatpush2.msra.mxu0 0.0
    %168 = vmatprep.subr.mxu0 0.0
    %169 = vmatpush2.msra.mxu0 0.0
    %170 = vmatprep.subr.mxu0 0.0
    %171 = vmatpush2.msra.mxu0 0.0
    %172 = vmatprep.subr.mxu0 0.0
    %173 = vmatpush2.msra.mxu0 0.0
    %174 = vmatprep.subr.mxu0 0.0
    %175 = vmatpush2.msra.mxu0 0.0
    %176 = vmatprep.subr.mxu0 0.0
    %177 = vmatpush2.msra.mxu0 0.0
    %178 = vmatprep.subr.mxu0 0.0
    %179 = vmatpush2.msra.mxu0 0.0
    %180 = vmatprep.subr.mxu0 0.0
    %181 = vmatpush2.msra.mxu0 0.0
    %182 = vmatprep.subr.mxu0 0.0
    %183 = vmatpush2.msra.mxu0 0.0
    %184 = vmatprep.subr.mxu0 0.0
    %185 = vmatpush2.msra.mxu0 0.0
    %186 = vmatprep.mubr.f32.mxu0 0.0
    %187 = vmatmul.mubr.f32.gmra.mxu0 %v116
    %v188 = vpop.f32.mrf.mxu0
    %v189 = vadd.f32 %v112, %v188
    %v190 = vpop.f32.mrf.mxu0
    %191 = vdwg.mxu0
    %vm192 = vcmask 64512
    %193 = vst.msk [vmem:[#allocation2] sm:$0xff] %vm192, %v189
    // Predicated region
    $region22: #{tpu_custom_call.1} parent=1 // pred_check
      _
    $region23: #{tpu_custom_call.1} parent=1 // pred_check_branch
      %195 = sbr.rel (0) target = $region25
    $region24: #{tpu_custom_call.1} parent=1 // pred_region
      %s197 = ssub.s32 128, 128
      %198 = vsyncadd [#allocation3], %s197
      %s200 = sshll.u32 [#allocation2], 4
      %s201 = int_to_ptr.vmem [resolvable:$true] %s200
      %203 = dma.vmem_to_hbm [thread:$0]  %s201, 128, %s5, [#allocation3]
    $region25: #{tpu_custom_call.1} parent=1 // pred_fallthru
      _
    // Predicated region
    $region26: #{tpu_custom_call.1} parent=1 // pred_check
      _
    $region27: #{tpu_custom_call.1} parent=1 // pred_check_branch
      %205 = sbr.rel (0) target = $region29
    $region28: #{tpu_custom_call.1} parent=1 // pred_region
      %206 = dma.done [#allocation3], 128
    $region29: #{tpu_custom_call.1} parent=1 // pred_fallthru
      _
    %207 = vsyncpa [#allocation3], 1

</llo_original>
